<compile_context>
chip_gen: v7x
topology: tpu7x:2x2x1
jax: 0.10.0
libtpu: 0.0.40
codegen_flags: <defaults>
</compile_context>

<pallas_src>
import jax
import jax.numpy as jnp
from jax.experimental import pallas as pl
from jax.experimental.pallas import tpu as pltpu


def _pop_mlp_kernel(x_ref, w1_ref, b1_ref, w2_ref, b2_ref, lab_ref,
                    logits_ref, loss_ref):
    # One grid step == one block of the population (all members batched
    # through a pair of batched MXU matmuls).
    pp, b, c = logits_ref.shape                               # (P_blk, B, C)

    x = x_ref[...]                                            # (B, D_in) bf16
    xb = jnp.broadcast_to(x[None], (pp,) + x.shape)           # (P_blk, B, D_in)

    # Layer 1: batched over population, contract D_in (weights kept in
    # PyTorch (P, H, D_in) layout -> no wrapper transpose). f32 accumulate.
    h = jnp.einsum('pbd,phd->pbh', xb, w1_ref[...],
                   preferred_element_type=jnp.float32)        # (P_blk, B, H)
    h = jnp.maximum(h + b1_ref[...], 0.0)                     # ReLU, f32

    # Layer 2: batched, contract H.
    logits = jnp.einsum('pbh,pch->pbc', h.astype(w2_ref.dtype), w2_ref[...],
                        preferred_element_type=jnp.float32)   # (P_blk, B, C)
    logits = logits + b2_ref[...]
    logits_ref[...] = logits.astype(logits_ref.dtype)

    # Cross entropy, reduction='none':  lse(logits) - logits[label]
    cls = jax.lax.broadcasted_iota(jnp.int32, (b, c), 1)      # (B, C)
    onehot = (cls == lab_ref[...]).astype(jnp.float32)        # (B, C)

    m = jnp.max(logits, axis=-1, keepdims=True)               # (P_blk, B, 1)
    sumexp = jnp.sum(jnp.exp(logits - m), axis=-1, keepdims=True)
    tgt = jnp.sum(logits * onehot[None], axis=-1, keepdims=True)
    loss = (m + jnp.log(sumexp) - tgt)[..., 0]                # (P_blk, B)
    loss_ref[0] = loss.astype(loss_ref.dtype)


def population_forward(data, pop_params, labels, num_classes):
    """Population-vmapped MLP forward + per-sample cross entropy.

    data:   (B, D_in) f32
    pop_params: {'l1.weight': (P, H, D_in), 'l1.bias': (P, H),
                 'l2.weight': (P, C, H),    'l2.bias': (P, C)}
    labels: (B,) int
    Returns: logits (P, B, C) f32, losses (P, B) f32
    """
    B, D_in = data.shape
    P, H, _ = pop_params["l1.weight"].shape
    C = num_classes

    # Split the (independent) population members across two grid steps so
    # v7x's two TensorCores each take half; near-free on v5e/v6e.
    num_blocks = 2 if P % 2 == 0 else 1
    PP = P // num_blocks

    # Glue: bf16 matmul inputs (f32 accumulation in-kernel), biases get a
    # broadcast dim, labels go in as a tiny int32 column.
    x = data.astype(jnp.bfloat16)
    w1 = pop_params["l1.weight"].astype(jnp.bfloat16)          # (P, H, D_in)
    b1 = pop_params["l1.bias"].astype(jnp.float32).reshape(P, 1, H)
    w2 = pop_params["l2.weight"].astype(jnp.bfloat16)          # (P, C, H)
    b2 = pop_params["l2.bias"].astype(jnp.float32).reshape(P, 1, C)
    lab = labels.astype(jnp.int32).reshape(B, 1)

    logits, losses = pl.pallas_call(
        _pop_mlp_kernel,
        out_shape=(
            jax.ShapeDtypeStruct((P, B, C), jnp.float32),
            jax.ShapeDtypeStruct((num_blocks, PP, B), jnp.float32),
        ),
        grid_spec=pltpu.PrefetchScalarGridSpec(
            num_scalar_prefetch=0,
            grid=(num_blocks,),
            in_specs=[
                pl.BlockSpec((B, D_in), lambda g: (0, 0)),
                pl.BlockSpec((PP, H, D_in), lambda g: (g, 0, 0)),
                pl.BlockSpec((PP, 1, H), lambda g: (g, 0, 0)),
                pl.BlockSpec((PP, C, H), lambda g: (g, 0, 0)),
                pl.BlockSpec((PP, 1, C), lambda g: (g, 0, 0)),
                pl.BlockSpec((B, 1), lambda g: (0, 0)),
            ],
            out_specs=[
                pl.BlockSpec((PP, B, C), lambda g: (g, 0, 0)),
                pl.BlockSpec((1, PP, B), lambda g: (g, 0, 0)),
            ],
        ),
        compiler_params=pltpu.CompilerParams(
            dimension_semantics=("parallel",)),
    )(x, w1, b1, w2, b2, lab)

    return logits, losses.reshape(P, B)


def _reference(data, pop_params, labels):
    # Pure-JAX f32 reference of the vmapped functional_call + cross entropy.
    def one(w1, b1, w2, b2):
        h = jnp.maximum(data @ w1.T + b1, 0.0)
        return h @ w2.T + b2
    logits = jax.vmap(one)(pop_params["l1.weight"], pop_params["l1.bias"],
                           pop_params["l2.weight"], pop_params["l2.bias"])
    lse = jax.nn.logsumexp(logits, axis=-1)
    tgt = jnp.take_along_axis(
        logits, labels[None, :, None].astype(jnp.int32), axis=-1)[..., 0]
    return logits, lse - tgt


if __name__ == "__main__":
    # PopulationWrapper hyper-params (only pop_size matters for forward()).
    pop_size, num_selected, tournament_size = 6, 4, 2
    init_std_dev = 0.1

    # net: Linear(D_in=32, H=32) -> ReLU -> Linear(H=32, C=16)
    B, D_in, H, C = 8, 32, 32, 16

    key = jax.random.PRNGKey(0)
    k_data, k_lab, k1, k2, k3, k4 = jax.random.split(key, 6)

    data = jax.random.normal(k_data, (B, D_in), dtype=jnp.float32)
    labels = jax.random.randint(k_lab, (B,), 0, C, dtype=jnp.int32)

    # Population params: randn(pop_size, *param.shape) * init_std_dev
    pop_params = {
        "l1.weight": jax.random.normal(k1, (pop_size, H, D_in), jnp.float32) * init_std_dev,
        "l1.bias":   jax.random.normal(k2, (pop_size, H), jnp.float32) * init_std_dev,
        "l2.weight": jax.random.normal(k3, (pop_size, C, H), jnp.float32) * init_std_dev,
        "l2.bias":   jax.random.normal(k4, (pop_size, C), jnp.float32) * init_std_dev,
    }

    logits, losses = population_forward(data, pop_params, labels, C)
    jax.block_until_ready((logits, losses))

    ref_logits, ref_losses = _reference(data, pop_params, labels)
    assert logits.shape == (pop_size, B, C)
    assert losses.shape == (pop_size, B)
    # bf16 matmul inputs (f32 accumulation) => loosened tolerance vs f32 ref.
    assert jnp.allclose(logits, ref_logits, atol=3e-2, rtol=3e-2), \
        float(jnp.max(jnp.abs(logits - ref_logits)))
    assert jnp.allclose(losses, ref_losses, atol=3e-2, rtol=3e-2), \
        float(jnp.max(jnp.abs(losses - ref_losses)))

    # TODO(synk): genetic_algorithm_step_ (top-k selection + tournament
    # crossover) and the individual_id / labels=None forward branches are
    # host-side / plain-JAX control paths, not the population-matmul hot loop.
    print("KERNEL_OK")
</pallas_src>

<mosaic_0001>
module attributes {stable_mosaic.version = 11 : i64} {
  func.func @_pop_mlp_kernel(%arg0: i32, %arg1: memref<8x32xbf16, #tpu.memory_space<vmem>>, %arg2: memref<3x32x32xbf16, #tpu.memory_space<vmem>>, %arg3: memref<3x1x32xf32, #tpu.memory_space<vmem>>, %arg4: memref<3x16x32xbf16, #tpu.memory_space<vmem>>, %arg5: memref<3x1x16xf32, #tpu.memory_space<vmem>>, %arg6: memref<8x1xi32, #tpu.memory_space<vmem>>, %arg7: memref<3x8x16xf32, #tpu.memory_space<vmem>>, %arg8: memref<1x3x8xf32, #tpu.memory_space<vmem>>) attributes {dimension_semantics = [#tpu.dimension_semantics<parallel>], iteration_bounds = array<i64: 2>, scalar_prefetch = 0 : i64, scratch_operands = 0 : i64, tpu.core_type = #tpu.core_type<tc>, window_params = [{pipeline_mode = #tpu.pipeline_mode<synchronous>, transform_indices = @transform_0, window_bounds = array<i64: 8, 32>}, {transform_indices = @transform_1, window_bounds = array<i64: 3, 32, 32>}, {transform_indices = @transform_2, window_bounds = array<i64: 3, 1, 32>}, {transform_indices = @transform_3, window_bounds = array<i64: 3, 16, 32>}, {transform_indices = @transform_4, window_bounds = array<i64: 3, 1, 16>}, {pipeline_mode = #tpu.pipeline_mode<synchronous>, transform_indices = @transform_5, window_bounds = array<i64: 8, 1>}, {transform_indices = @transform_6, window_bounds = array<i64: 3, 8, 16>}, {transform_indices = @transform_7, window_bounds = array<i64: 1, 3, 8>}]} {
    %c0 = arith.constant 0 : index
    %c0_0 = arith.constant 0 : index
    %0 = vector.load %arg1[%c0, %c0_0] : memref<8x32xbf16, #tpu.memory_space<vmem>>, vector<8x32xbf16>
    %1 = vector.shape_cast %0 : vector<8x32xbf16> to vector<1x8x32xbf16>
    %2 = vector.shape_cast %1 : vector<1x8x32xbf16> to vector<1x8x32xbf16>
    %3 = vector.broadcast %2 : vector<1x8x32xbf16> to vector<3x8x32xbf16>
    %c0_1 = arith.constant 0 : index
    %c0_2 = arith.constant 0 : index
    %c0_3 = arith.constant 0 : index
    %4 = vector.load %arg2[%c0_1, %c0_2, %c0_3] : memref<3x32x32xbf16, #tpu.memory_space<vmem>>, vector<3x32x32xbf16>
    "tpu.trace_start"() <{level = 10 : i32, message = "pbd,phd->pbh"}> : () -> ()
    %cst = arith.constant dense<0.000000e+00> : vector<3x8x32xf32>
    %5 = tpu.matmul %3, %4, %cst {dimension_numbers = #tpu.dot_dimension_numbers<[2], [2], [1], [1], [0, 0, 0, 1, 1, 1], [0], [0]>} : vector<3x8x32xbf16>, vector<3x32x32xbf16>, vector<3x8x32xf32> -> vector<3x8x32xf32>
    "tpu.trace_stop"() : () -> ()
    %c0_4 = arith.constant 0 : index
    %c0_5 = arith.constant 0 : index
    %c0_6 = arith.constant 0 : index
    %6 = vector.load %arg3[%c0_4, %c0_5, %c0_6] : memref<3x1x32xf32, #tpu.memory_space<vmem>>, vector<3x1x32xf32>
    %7 = vector.broadcast %6 : vector<3x1x32xf32> to vector<3x8x32xf32>
    %8 = arith.addf %5, %7 : vector<3x8x32xf32>
    %cst_7 = arith.constant 0.000000e+00 : f32
    %9 = vector.broadcast %cst_7 : f32 to vector<3x8x32xf32>
    %10 = arith.maximumf %8, %9 : vector<3x8x32xf32>
    %11 = arith.truncf %10 : vector<3x8x32xf32> to vector<3x8x32xbf16>
    %c0_8 = arith.constant 0 : index
    %c0_9 = arith.constant 0 : index
    %c0_10 = arith.constant 0 : index
    %12 = vector.load %arg4[%c0_8, %c0_9, %c0_10] : memref<3x16x32xbf16, #tpu.memory_space<vmem>>, vector<3x16x32xbf16>
    "tpu.trace_start"() <{level = 10 : i32, message = "pbh,pch->pbc"}> : () -> ()
    %cst_11 = arith.constant dense<0.000000e+00> : vector<3x8x16xf32>
    %13 = tpu.matmul %11, %12, %cst_11 {dimension_numbers = #tpu.dot_dimension_numbers<[2], [2], [1], [1], [0, 0, 0, 1, 1, 1], [0], [0]>} : vector<3x8x32xbf16>, vector<3x16x32xbf16>, vector<3x8x16xf32> -> vector<3x8x16xf32>
    "tpu.trace_stop"() : () -> ()
    %c0_12 = arith.constant 0 : index
    %c0_13 = arith.constant 0 : index
    %c0_14 = arith.constant 0 : index
    %14 = vector.load %arg5[%c0_12, %c0_13, %c0_14] : memref<3x1x16xf32, #tpu.memory_space<vmem>>, vector<3x1x16xf32>
    %15 = vector.broadcast %14 : vector<3x1x16xf32> to vector<3x8x16xf32>
    %16 = arith.addf %13, %15 : vector<3x8x16xf32>
    %c0_15 = arith.constant 0 : index
    %c0_16 = arith.constant 0 : index
    %c0_17 = arith.constant 0 : index
    %17 = vector.load %arg7[%c0_15, %c0_16, %c0_17] : memref<3x8x16xf32, #tpu.memory_space<vmem>>, vector<3x8x16xf32>
    tpu.vector_store %arg7[%c0_15, %c0_16, %c0_17], %16 {strides = array<i32>} : memref<3x8x16xf32, #tpu.memory_space<vmem>>, vector<3x8x16xf32>,
    %18 = tpu.iota {dimensions = array<i32: 1>} : vector<8x16xi32>
    %c0_18 = arith.constant 0 : index
    %c0_19 = arith.constant 0 : index
    %19 = vector.load %arg6[%c0_18, %c0_19] : memref<8x1xi32, #tpu.memory_space<vmem>>, vector<8x1xi32>
    %20 = vector.broadcast %19 : vector<8x1xi32> to vector<8x16xi32>
    %21 = arith.cmpi eq, %18, %20 : vector<8x16xi32>
    %22 = arith.extui %21 : vector<8x16xi1> to vector<8x16xi32>
    %23 = arith.sitofp %22 : vector<8x16xi32> to vector<8x16xf32>
    %cst_20 = arith.constant dense<0xFF800000> : vector<3x8xf32>
    %24 = vector.multi_reduction <maximumf>, %16, %cst_20 [2] : vector<3x8x16xf32> to vector<3x8xf32>
    %25 = vector.shape_cast %24 : vector<3x8xf32> to vector<3x8x1xf32>
    %26 = vector.broadcast %25 : vector<3x8x1xf32> to vector<3x8x16xf32>
    %27 = arith.subf %16, %26 : vector<3x8x16xf32>
    %28 = math.exp %27 : vector<3x8x16xf32>
    %cst_21 = arith.constant dense<0.000000e+00> : vector<3x8xf32>
    %29 = vector.multi_reduction <add>, %28, %cst_21 [2] : vector<3x8x16xf32> to vector<3x8xf32>
    %30 = vector.shape_cast %29 : vector<3x8xf32> to vector<3x8x1xf32>
    %31 = vector.shape_cast %23 : vector<8x16xf32> to vector<1x8x16xf32>
    %32 = vector.broadcast %31 : vector<1x8x16xf32> to vector<3x8x16xf32>
    %33 = arith.mulf %16, %32 : vector<3x8x16xf32>
    %cst_22 = arith.constant dense<0.000000e+00> : vector<3x8xf32>
    %34 = vector.multi_reduction <add>, %33, %cst_22 [2] : vector<3x8x16xf32> to vector<3x8xf32>
    %35 = vector.shape_cast %34 : vector<3x8xf32> to vector<3x8x1xf32>
    %36 = math.log %30 : vector<3x8x1xf32>
    %37 = arith.addf %25, %36 : vector<3x8x1xf32>
    %38 = arith.subf %37, %35 : vector<3x8x1xf32>
    %39 = vector.shape_cast %38 : vector<3x8x1xf32> to vector<3x8xf32>
    %c0_23 = arith.constant 0 : index
    %c0_24 = arith.constant 0 : index
    %c0_25 = arith.constant 0 : index
    %40 = vector.load %arg8[%c0_23, %c0_24, %c0_25] : memref<1x3x8xf32, #tpu.memory_space<vmem>>, vector<1x3x8xf32>
    %41 = vector.shape_cast %40 : vector<1x3x8xf32> to vector<3x8xf32>
    %42 = vector.shape_cast %39 : vector<3x8xf32> to vector<1x3x8xf32>
    tpu.vector_store %arg8[%c0_23, %c0_24, %c0_25], %42 {strides = array<i32>} : memref<1x3x8xf32, #tpu.memory_space<vmem>>, vector<1x3x8xf32>,
    return
  }
  func.func @transform_0(%arg0: i32) -> (i32, i32) {
    %c0_i32 = arith.constant 0 : i32
    %c0_i32_0 = arith.constant 0 : i32
    %c0_i32_1 = arith.constant 0 : i32
    return %c0_i32, %c0_i32_0 : i32, i32
  }
  func.func @transform_1(%arg0: i32) -> (i32, i32, i32) {
    %c0_i32 = arith.constant 0 : i32
    %c0_i32_0 = arith.constant 0 : i32
    %c0_i32_1 = arith.constant 0 : i32
    return %arg0, %c0_i32, %c0_i32_0 : i32, i32, i32
  }
  func.func @transform_2(%arg0: i32) -> (i32, i32, i32) {
    %c0_i32 = arith.constant 0 : i32
    %c0_i32_0 = arith.constant 0 : i32
    %c0_i32_1 = arith.constant 0 : i32
    return %arg0, %c0_i32, %c0_i32_0 : i32, i32, i32
  }
  func.func @transform_3(%arg0: i32) -> (i32, i32, i32) {
    %c0_i32 = arith.constant 0 : i32
    %c0_i32_0 = arith.constant 0 : i32
    %c0_i32_1 = arith.constant 0 : i32
    return %arg0, %c0_i32, %c0_i32_0 : i32, i32, i32
  }
  func.func @transform_4(%arg0: i32) -> (i32, i32, i32) {
    %c0_i32 = arith.constant 0 : i32
    %c0_i32_0 = arith.constant 0 : i32
    %c0_i32_1 = arith.constant 0 : i32
    return %arg0, %c0_i32, %c0_i32_0 : i32, i32, i32
  }
  func.func @transform_5(%arg0: i32) -> (i32, i32) {
    %c0_i32 = arith.constant 0 : i32
    %c0_i32_0 = arith.constant 0 : i32
    %c0_i32_1 = arith.constant 0 : i32
    return %c0_i32, %c0_i32_0 : i32, i32
  }
  func.func @transform_6(%arg0: i32) -> (i32, i32, i32) {
    %c0_i32 = arith.constant 0 : i32
    %c0_i32_0 = arith.constant 0 : i32
    %c0_i32_1 = arith.constant 0 : i32
    return %arg0, %c0_i32, %c0_i32_0 : i32, i32, i32
  }
  func.func @transform_7(%arg0: i32) -> (i32, i32, i32) {
    %c0_i32 = arith.constant 0 : i32
    %c0_i32_0 = arith.constant 0 : i32
    %c0_i32_1 = arith.constant 0 : i32
    return %arg0, %c0_i32, %c0_i32_0 : i32, i32, i32
  }
}

</mosaic_0001>

<llo_original>
// kernel: tpu_custom_call.1
$region0: #{tpu_custom_call.1}
  #allocation0 [shape = 'u32[]', space=smem, size = 0x4, offset = 0x4, fixed_abs, tag = 'smem constant byte address 0x4 - core index']
  #allocation1 [shape = 'u32[144,128]{1,0:T(1,128)}', space=vmem, size = 0x12000, scoped, tag = 'internal scratch']
  %s0 = inlined_call_operand.hbm [shape: bf16[8,32], index: 0, kind: input, shape index: {}]
  %s1 = inlined_call_operand.hbm [shape: bf16[6,32,32], index: 1, kind: input, shape index: {}]
  %s2 = inlined_call_operand.vmem [shape: f32[6,1,32], index: 2, kind: input, shape index: {}]
  %s3 = inlined_call_operand.hbm [shape: bf16[6,16,32], index: 3, kind: input, shape index: {}]
  %s4 = inlined_call_operand.vmem [shape: f32[6,1,16], index: 4, kind: input, shape index: {}]
  %s5 = inlined_call_operand.vmem [shape: s32[8,1], index: 5, kind: input, shape index: {}]
  %s6 = inlined_call_operand.hbm [shape: f32[6,8,16], index: 6, kind: output, shape index: {0}]
  %s7 = inlined_call_operand.vmem [shape: f32[2,3,8], index: 7, kind: output, shape index: {1}]
  %8 = xla_tuple %s6, %s7
  %s9 = sld [smem:[#allocation0]]
  $region77: #{tpu_custom_call.1} parent=0
    _
  %s11 = ssub.s32 1, %s9
  %s12 = scalar_select 0, %s11, %s9
  $region1: #{tpu_custom_call.1} parent=0
    #allocation2 [shape = 'u8[2048]{0}', space=vmem, size = 0x800, scoped, tag = 'input window, operand 0, single buffered']
    #allocation3 [shape = 's32[2]{0}', space=sflag, size = 0x8, scoped, tag = 'scoped memory for tpu_custom_call.1']
    #allocation4 [shape = 's32[2]{0}', space=sflag, size = 0x8, scoped, tag = 'scoped memory for tpu_custom_call.1']
    #allocation5 [shape = 'u8[49152]{0}', space=vmem, size = 0xc000, scoped, tag = 'input window, operand 1']
    #allocation6 [shape = 's32[2]{0}', space=sflag, size = 0x8, scoped, tag = 'scoped memory for tpu_custom_call.1']
    #allocation7 [shape = 'u8[24576]{0}', space=vmem, size = 0x6000, scoped, tag = 'input window, operand 3']
    #allocation8 [shape = 'u8[24576]{0}', space=vmem, size = 0x6000, scoped, tag = 'output window, operand 0']
    %13 = vsyncpa [#allocation3], 0
    %14 = vsyncpa [#allocation6], 0
    %s15 = scalar_lea.sflag [#allocation6], 1
    %16 = vsyncpa %s15, 0
    %17 = vsyncpa [#allocation4], 0
    %s18 = scalar_lea.sflag [#allocation4], 1
    %19 = vsyncpa %s18, 0
    loop: start=0, step=1, limit=4
    $region2: #{tpu_custom_call.1} parent=1 // loop_pre_header
      _
    $region3: #{tpu_custom_call.1} parent=1 // loop_header
      %s21 = sphi 0, %s25
      %p22 = scmp.ge.s32.totalorder %s21, 4
      %s29 = sphi 0, %s29
      %s31 = sphi 0, %s29
      %s32 = sphi 0, %s31
      %s46 = sphi 0, %s32
      %s52 = sphi 0, %s54
      %s55 = sphi 0, %s52
      %s56 = sphi 0, %s55
      %s72 = sphi 0, %s56
      %s78 = sphi 0, %s80
      %s81 = sphi 0, %s78
      %s82 = sphi 0, %s81
      %s98 = sphi 0, %s82
      %s104 = sphi 0, %s106
      %s107 = sphi 0, %s104
      %s108 = sphi 0, %s107
      %s124 = sphi 0, %s108
      %s130 = sphi 0, %s132
      %s133 = sphi 0, %s130
      %s134 = sphi 0, %s133
      %s150 = sphi 0, %s134
      %s154 = sphi 0, %s154
      %s156 = sphi 0, %s154
      %s157 = sphi 0, %s156
      %s171 = sphi 0, %s157
      %s177 = sphi 0, %s179
      %s180 = sphi 0, %s177
      %s181 = sphi 0, %s180
      %s197 = sphi 0, %s181
      %s203 = sphi 0, %s205
      %s206 = sphi 0, %s203
      %s207 = sphi 0, %s206
      %s223 = sphi 0, %s207
    $region4: #{tpu_custom_call.1} parent=1 // loop_header_branch
      %24 = sbr.rel (%p22) target = $region8
    $region5: #{tpu_custom_call.1} parent=1 // loop_body
      %s26 = ssub.s32 %s21, 1
      %s27 = ssub.s32 %s21, 2
      %s28 = sadd.s32 %s21, 1
      %s30 = sadd.s32 %s29, 1
      %p33 = scmp.eq.s32.totalorder %s21, 1
      %p34 = scmp.ne.s32.totalorder %s29, %s31
      %p35 = scmp.eq.s32.totalorder %s21, 0
      %p36 = por %p34, %p35
      %p37 = scmp.ne.s32.totalorder %s29, %s31
      %p38 = scmp.eq.s32.totalorder %s26, 1
      %p39 = por %p37, %p38
      %p40 = scmp.ne.s32.totalorder %s31, %s32
      %p41 = scmp.eq.s32.totalorder %s26, 0
      %p42 = por %p40, %p41
      %p43 = scmp.ne.s32.totalorder %s31, %s32
      %p44 = scmp.eq.s32.totalorder %s27, 1
      %p45 = por %p43, %p44
      %p47 = scmp.ne.s32.totalorder %s32, %s46
      %p48 = scmp.eq.s32.totalorder %s27, 0
      %p49 = por %p47, %p48
      %s50 = ssub.s32 %s21, %s28
      %p51 = scmp.eq.s32.totalorder %s50, 0
      %s53 = sadd.s32 %s52, 1
      %s54 = scalar_select %p51, %s52, %s53
      %p57 = pneg %p51
      %p58 = scmp.eq.s32.totalorder %s21, 1
      %p59 = por %p57, %p58
      %p60 = scmp.ne.s32.totalorder %s52, %s55
      %p61 = scmp.eq.s32.totalorder %s21, 0
      %p62 = por %p60, %p61
      %p63 = scmp.ne.s32.totalorder %s52, %s55
      %p64 = scmp.eq.s32.totalorder %s26, 1
      %p65 = por %p63, %p64
      %p66 = scmp.ne.s32.totalorder %s55, %s56
      %p67 = scmp.eq.s32.totalorder %s26, 0
      %p68 = por %p66, %p67
      %p69 = scmp.ne.s32.totalorder %s55, %s56
      %p70 = scmp.eq.s32.totalorder %s27, 1
      %p71 = por %p69, %p70
      %p73 = scmp.ne.s32.totalorder %s56, %s72
      %p74 = scmp.eq.s32.totalorder %s27, 0
      %p75 = por %p73, %p74
      %s76 = ssub.s32 %s21, %s28
      %p77 = scmp.eq.s32.totalorder %s76, 0
      %s79 = sadd.s32 %s78, 1
      %s80 = scalar_select %p77, %s78, %s79
      %p83 = pneg %p77
      %p84 = scmp.eq.s32.totalorder %s21, 1
      %p85 = por %p83, %p84
      %p86 = scmp.ne.s32.totalorder %s78, %s81
      %p87 = scmp.eq.s32.totalorder %s21, 0
      %p88 = por %p86, %p87
      %p89 = scmp.ne.s32.totalorder %s78, %s81
      %p90 = scmp.eq.s32.totalorder %s26, 1
      %p91 = por %p89, %p90
      %p92 = scmp.ne.s32.totalorder %s81, %s82
      %p93 = scmp.eq.s32.totalorder %s26, 0
      %p94 = por %p92, %p93
      %p95 = scmp.ne.s32.totalorder %s81, %s82
      %p96 = scmp.eq.s32.totalorder %s27, 1
      %p97 = por %p95, %p96
      %p99 = scmp.ne.s32.totalorder %s82, %s98
      %p100 = scmp.eq.s32.totalorder %s27, 0
      %p101 = por %p99, %p100
      %s102 = ssub.s32 %s21, %s28
      %p103 = scmp.eq.s32.totalorder %s102, 0
      %s105 = sadd.s32 %s104, 1
      %s106 = scalar_select %p103, %s104, %s105
      %p109 = pneg %p103
      %p110 = scmp.eq.s32.totalorder %s21, 1
      %p111 = por %p109, %p110
      %p112 = scmp.ne.s32.totalorder %s104, %s107
      %p113 = scmp.eq.s32.totalorder %s21, 0
      %p114 = por %p112, %p113
      %p115 = scmp.ne.s32.totalorder %s104, %s107
      %p116 = scmp.eq.s32.totalorder %s26, 1
      %p117 = por %p115, %p116
      %p118 = scmp.ne.s32.totalorder %s107, %s108
      %p119 = scmp.eq.s32.totalorder %s26, 0
      %p120 = por %p118, %p119
      %p121 = scmp.ne.s32.totalorder %s107, %s108
      %p122 = scmp.eq.s32.totalorder %s27, 1
      %p123 = por %p121, %p122
      %p125 = scmp.ne.s32.totalorder %s108, %s124
      %p126 = scmp.eq.s32.totalorder %s27, 0
      %p127 = por %p125, %p126
      %s128 = ssub.s32 %s21, %s28
      %p129 = scmp.eq.s32.totalorder %s128, 0
      %s131 = sadd.s32 %s130, 1
      %s132 = scalar_select %p129, %s130, %s131
      %p135 = pneg %p129
      %p136 = scmp.eq.s32.totalorder %s21, 1
      %p137 = por %p135, %p136
      %p138 = scmp.ne.s32.totalorder %s130, %s133
      %p139 = scmp.eq.s32.totalorder %s21, 0
      %p140 = por %p138, %p139
      %p141 = scmp.ne.s32.totalorder %s130, %s133
      %p142 = scmp.eq.s32.totalorder %s26, 1
      %p143 = por %p141, %p142
      %p144 = scmp.ne.s32.totalorder %s133, %s134
      %p145 = scmp.eq.s32.totalorder %s26, 0
      %p146 = por %p144, %p145
      %p147 = scmp.ne.s32.totalorder %s133, %s134
      %p148 = scmp.eq.s32.totalorder %s27, 1
      %p149 = por %p147, %p148
      %p151 = scmp.ne.s32.totalorder %s134, %s150
      %p152 = scmp.eq.s32.totalorder %s27, 0
      %p153 = por %p151, %p152
      %s155 = sadd.s32 %s154, 1
      %p158 = scmp.eq.s32.totalorder %s21, 1
      %p159 = scmp.ne.s32.totalorder %s154, %s156
      %p160 = scmp.eq.s32.totalorder %s21, 0
      %p161 = por %p159, %p160
      %p162 = scmp.ne.s32.totalorder %s154, %s156
      %p163 = scmp.eq.s32.totalorder %s26, 1
      %p164 = por %p162, %p163
      %p165 = scmp.ne.s32.totalorder %s156, %s157
      %p166 = scmp.eq.s32.totalorder %s26, 0
      %p167 = por %p165, %p166
      %p168 = scmp.ne.s32.totalorder %s156, %s157
      %p169 = scmp.eq.s32.totalorder %s27, 1
      %p170 = por %p168, %p169
      %p172 = scmp.ne.s32.totalorder %s157, %s171
      %p173 = scmp.eq.s32.totalorder %s27, 0
      %p174 = por %p172, %p173
      %s175 = ssub.s32 %s21, %s28
      %p176 = scmp.eq.s32.totalorder %s175, 0
      %s178 = sadd.s32 %s177, 1
      %s179 = scalar_select %p176, %s177, %s178
      %p182 = pneg %p176
      %p183 = scmp.eq.s32.totalorder %s21, 1
      %p184 = por %p182, %p183
      %p185 = scmp.ne.s32.totalorder %s177, %s180
      %p186 = scmp.eq.s32.totalorder %s21, 0
      %p187 = por %p185, %p186
      %p188 = scmp.ne.s32.totalorder %s177, %s180
      %p189 = scmp.eq.s32.totalorder %s26, 1
      %p190 = por %p188, %p189
      %p191 = scmp.ne.s32.totalorder %s180, %s181
      %p192 = scmp.eq.s32.totalorder %s26, 0
      %p193 = por %p191, %p192
      %p194 = scmp.ne.s32.totalorder %s180, %s181
      %p195 = scmp.eq.s32.totalorder %s27, 1
      %p196 = por %p194, %p195
      %p198 = scmp.ne.s32.totalorder %s181, %s197
      %p199 = scmp.eq.s32.totalorder %s27, 0
      %p200 = por %p198, %p199
      %s201 = ssub.s32 %s21, %s28
      %p202 = scmp.eq.s32.totalorder %s201, 0
      %s204 = sadd.s32 %s203, 1
      %s205 = scalar_select %p202, %s203, %s204
      %p208 = pneg %p202
      %p209 = scmp.eq.s32.totalorder %s21, 1
      %p210 = por %p208, %p209
      %p211 = scmp.ne.s32.totalorder %s203, %s206
      %p212 = scmp.eq.s32.totalorder %s21, 0
      %p213 = por %p211, %p212
      %p214 = scmp.ne.s32.totalorder %s203, %s206
      %p215 = scmp.eq.s32.totalorder %s26, 1
      %p216 = por %p214, %p215
      %p217 = scmp.ne.s32.totalorder %s206, %s207
      %p218 = scmp.eq.s32.totalorder %s26, 0
      %p219 = por %p217, %p218
      %p220 = scmp.ne.s32.totalorder %s206, %s207
      %p221 = scmp.eq.s32.totalorder %s27, 1
      %p222 = por %p220, %p221
      %p224 = scmp.ne.s32.totalorder %s207, %s223
      %p225 = scmp.eq.s32.totalorder %s27, 0
      %p226 = por %p224, %p225
      %p227 = scmp.le.s32.totalorder 1, %s21
      %p228 = scmp.lt.s32.totalorder %s21, 3
      %p229 = pnand %p227, %p228
      %p230 = pneg %p229
      // Predicated region
      $region9: #{tpu_custom_call.1} parent=5 // pred_check
        _
      $region10: #{tpu_custom_call.1} parent=5 // pred_check_branch
        %232 = sbr.rel (%p229) target = $region12
      $region11: #{tpu_custom_call.1} parent=5 // pred_region
        %s233 = ssub.s32 %s21, 1
        // Predicated region
        $region13: #{tpu_custom_call.1} parent=11 // pred_check
          %p234 = pneg %p42
        $region14: #{tpu_custom_call.1} parent=11 // pred_check_branch
          %236 = sbr.rel (%p234) target = $region16
        $region15: #{tpu_custom_call.1} parent=11 // pred_region
          %s238 = ssub.s32 64, 64
          %239 = vsyncadd [#allocation3], %s238
          %s241 = sshll.u32 [#allocation2], 4
          %s242 = int_to_ptr.vmem [resolvable:$true] %s241
          %244 = dma.hbm_to_vmem [thread:$0]  %s0, 64, %s242, [#allocation3]
        $region16: #{tpu_custom_call.1} parent=11 // pred_fallthru
          _
        // Predicated region
        $region17: #{tpu_custom_call.1} parent=11 // pred_check
          %p245 = pneg %p167
        $region18: #{tpu_custom_call.1} parent=11 // pred_check_branch
          %247 = sbr.rel (%p245) target = $region20
        $region19: #{tpu_custom_call.1} parent=11 // pred_region
          _
        $region20: #{tpu_custom_call.1} parent=11 // pred_fallthru
          _
      $region12: #{tpu_custom_call.1} parent=5 // pred_fallthru
        _
      %p248 = scmp.lt.s32.totalorder %s21, 2
      // Predicated region
      $region21: #{tpu_custom_call.1} parent=5 // pred_check
        %p249 = pneg %p248
      $region22: #{tpu_custom_call.1} parent=5 // pred_check_branch
        %251 = sbr.rel (%p249) target = $region24
      $region23: #{tpu_custom_call.1} parent=5 // pred_region
        // Predicated region
        $region25: #{tpu_custom_call.1} parent=23 // pred_check
          %p252 = pneg %p62
        $region26: #{tpu_custom_call.1} parent=23 // pred_check_branch
          %254 = sbr.rel (%p252) target = $region28
        $region27: #{tpu_custom_call.1} parent=23 // pred_region
          %s255 = sand.u32 %s21, 1
          %s256 = scalar_lea.sflag [#allocation6], %s255
          %s257 = sand.u32 %s52, 1
          %s258 = smul.addr %s257, 48
          %s259 = scalar_lea.vmem [#allocation5], %s258
          %s260 = smul.u32 3, %s21
          %s262 = ssub.s32 768, 768
          %263 = vsyncadd %s256, %s262
          %s264 = smul.addr %s260, 4
          %s265 = smul.addr %s264, 64
          %s266 = scalar_lea.hbm %s1, %s265
          %s267 = sshll.u32 %s259, 4
          %s268 = int_to_ptr.vmem [resolvable:$true] %s267
          %273 = dma.hbm_to_vmem [thread:$0]  %s266, 768, %s268, %s256, 64, 64, 4
        $region28: #{tpu_custom_call.1} parent=23 // pred_fallthru
          _
        // Predicated region
        $region29: #{tpu_custom_call.1} parent=23 // pred_check
          %p274 = pneg %p88
        $region30: #{tpu_custom_call.1} parent=23 // pred_check_branch
          %276 = sbr.rel (%p274) target = $region32
        $region31: #{tpu_custom_call.1} parent=23 // pred_region
          %s277 = smul.u32 3, %s21
          %p278 = scmp.lt.s32.totalorder %s277, 5
          %s279 = scalar_select %p278, %s277, 5
          %s280 = scalar_lea.vmem %s2, %s279
          %s281 = smul.u32 3, %s21
        $region32: #{tpu_custom_call.1} parent=23 // pred_fallthru
          _
        // Predicated region
        $region33: #{tpu_custom_call.1} parent=23 // pred_check
          %p282 = pneg %p114
        $region34: #{tpu_custom_call.1} parent=23 // pred_check_branch
          %284 = sbr.rel (%p282) target = $region36
        $region35: #{tpu_custom_call.1} parent=23 // pred_region
          %s285 = sand.u32 %s21, 1
          %s286 = scalar_lea.sflag [#allocation6], %s285
          %s287 = sand.u32 %s104, 1
          %s288 = smul.addr %s287, 24
          %s289 = scalar_lea.vmem [#allocation7], %s288
          %s290 = smul.u32 3, %s21
          %s292 = ssub.s32 384, 384
          %293 = vsyncadd %s286, %s292
          %s294 = smul.addr %s290, 2
          %s295 = smul.addr %s294, 64
          %s296 = scalar_lea.hbm %s3, %s295
          %s297 = sshll.u32 %s289, 4
          %s298 = int_to_ptr.vmem [resolvable:$true] %s297
          %303 = dma.hbm_to_vmem [thread:$0]  %s296, 384, %s298, %s286, 64, 64, 4
        $region36: #{tpu_custom_call.1} parent=23 // pred_fallthru
          _
        // Predicated region
        $region37: #{tpu_custom_call.1} parent=23 // pred_check
          %p304 = pneg %p140
        $region38: #{tpu_custom_call.1} parent=23 // pred_check_branch
          %306 = sbr.rel (%p304) target = $region40
        $region39: #{tpu_custom_call.1} parent=23 // pred_region
          %s307 = smul.u32 3, %s21
          %p308 = scmp.lt.s32.totalorder %s307, 5
          %s309 = scalar_select %p308, %s307, 5
          %s310 = scalar_lea.vmem %s4, %s309
          %s311 = smul.u32 3, %s21
        $region40: #{tpu_custom_call.1} parent=23 // pred_fallthru
          _
      $region24: #{tpu_custom_call.1} parent=5 // pred_fallthru
        _
      %p312 = scmp.le.s32.totalorder 1, %s21
      %p313 = scmp.lt.s32.totalorder %s21, 3
      %p314 = pnand %p312, %p313
      %p315 = pneg %p314
      // Predicated region
      $region41: #{tpu_custom_call.1} parent=5 // pred_check
        _
      $region42: #{tpu_custom_call.1} parent=5 // pred_check_branch
        %317 = sbr.rel (%p314) target = $region44
      $region43: #{tpu_custom_call.1} parent=5 // pred_region
        %s318 = ssub.s32 %s21, 1
        // Predicated region
        $region45: #{tpu_custom_call.1} parent=43 // pred_check
          %p319 = pneg %p42
        $region46: #{tpu_custom_call.1} parent=43 // pred_check_branch
          %321 = sbr.rel (%p319) target = $region48
        $region47: #{tpu_custom_call.1} parent=43 // pred_region
          %322 = dma.done [#allocation3], 64
        $region48: #{tpu_custom_call.1} parent=43 // pred_fallthru
          _
        %s323 = sand.u32 %s26, 1
        %s324 = scalar_lea.sflag [#allocation6], %s323
        %s325 = sand.u32 %s55, 1
        %s326 = smul.addr %s325, 48
        %s327 = scalar_lea.vmem [#allocation5], %s326
        // Predicated region
        $region49: #{tpu_custom_call.1} parent=43 // pred_check
          %p328 = pneg %p68
        $region50: #{tpu_custom_call.1} parent=43 // pred_check_branch
          %330 = sbr.rel (%p328) target = $region52
        $region51: #{tpu_custom_call.1} parent=43 // pred_region
          %331 = dma.done %s324, 768
        $region52: #{tpu_custom_call.1} parent=43 // pred_fallthru
          _
        %s332 = sand.u32 %s26, 1
        %s333 = scalar_lea.sflag [#allocation6], %s332
        %s334 = sand.u32 %s107, 1
        %s335 = smul.addr %s334, 24
        %s336 = scalar_lea.vmem [#allocation7], %s335
        // Predicated region
        $region53: #{tpu_custom_call.1} parent=43 // pred_check
          %p337 = pneg %p120
        $region54: #{tpu_custom_call.1} parent=43 // pred_check_branch
          %339 = sbr.rel (%p337) target = $region56
        $region55: #{tpu_custom_call.1} parent=43 // pred_region
          %340 = dma.done %s333, 384
        $region56: #{tpu_custom_call.1} parent=43 // pred_fallthru
          _
        %p341 = pneg %p42
        %p342 = pneg %p39
        %s343 = sand.u32 %s26, 1
        %s344 = scalar_lea.sflag [#allocation6], %s343
        %s345 = sand.u32 %s55, 1
        %s346 = smul.addr %s345, 48
        %s347 = scalar_lea.vmem [#allocation5], %s346
        %p348 = pneg %p68
        %p349 = pneg %p65
        %s350 = smul.u32 3, %s26
        %p351 = scmp.lt.s32.totalorder %s350, 5
        %s352 = scalar_select %p351, %s350, 5
        %s353 = scalar_lea.vmem %s2, %s352
        %p354 = pneg %p94
        %p355 = pneg %p91
        %s356 = sand.u32 %s26, 1
        %s357 = scalar_lea.sflag [#allocation6], %s356
        %s358 = sand.u32 %s107, 1
        %s359 = smul.addr %s358, 24
        %s360 = scalar_lea.vmem [#allocation7], %s359
        %p361 = pneg %p120
        %p362 = pneg %p117
        %s363 = smul.u32 3, %s26
        %p364 = scmp.lt.s32.totalorder %s363, 5
        %s365 = scalar_select %p364, %s363, 5
        %s366 = scalar_lea.vmem %s4, %s365
        %p367 = pneg %p146
        %p368 = pneg %p143
        %p369 = pneg %p167
        %p370 = pneg %p164
        %p371 = pneg %p193
        %p372 = pneg %p190
        %s373 = sand.u32 %s180, 1
        %s374 = scalar_lea.sflag [#allocation4], %s373
        %s375 = sand.u32 %s180, 1
        %s376 = smul.addr %s375, 24
        %s377 = scalar_lea.vmem [#allocation8], %s376
        %p378 = pneg %p219
        %p379 = pneg %p216
        %p380 = scmp.lt.s32.totalorder %s26, 1
        %s381 = scalar_select %p380, %s26, 1
        %s382 = smul.addr %s381, 4
        %s383 = scalar_lea.vmem %s7, %s382
        %s384 = smul.u32 3, %s26
        %s385 = smul.u32 3, %s26
        %p386 = scmp.lt.s32.totalorder %s385, 5
        %s387 = scalar_select %p386, %s385, 5
        %s388 = scalar_lea.vmem %s2, %s387
        %s389 = smul.u32 3, %s26
        %s390 = smul.u32 3, %s26
        %s391 = smul.u32 3, %s26
        %p392 = scmp.lt.s32.totalorder %s391, 5
        %s393 = scalar_select %p392, %s391, 5
        %s394 = scalar_lea.vmem %s4, %s393
        %s395 = smul.u32 3, %s26
        %s396 = smul.u32 3, %s26
        %p397 = scmp.lt.s32.totalorder %s26, 1
        %s398 = scalar_select %p397, %s26, 1
        %s399 = smul.addr %s398, 4
        %s400 = scalar_lea.vmem %s7, %s399
        %v402 = vld [vmem:[#allocation2] sm:$0xf]
        %v403 = vld [vmem:[%s327] sm:$0xf]
        %v404 = vld [vmem:[%s327 + $0x4] sm:$0xf]
        %v405 = vld [vmem:[%s327 + $0x8] sm:$0xf]
        %v406 = vld [vmem:[%s327 + $0xc] sm:$0xf]
        %v407 = vld [vmem:[%s327 + $0x10] sm:$0xf]
        %v408 = vld [vmem:[%s327 + $0x14] sm:$0xf]
        %v409 = vld [vmem:[%s327 + $0x18] sm:$0xf]
        %v410 = vld [vmem:[%s327 + $0x1c] sm:$0xf]
        %v411 = vld [vmem:[%s327 + $0x20] sm:$0xf]
        %v412 = vld [vmem:[%s327 + $0x24] sm:$0xf]
        %v413 = vld [vmem:[%s327 + $0x28] sm:$0xf]
        %v414 = vld [vmem:[%s327 + $0x2c] sm:$0xf]
        %v415 = vld [vmem:[%s388] sm:$0x1]
        %v416 = vld [vmem:[%s388 + $0x1] sm:$0x1]
        %v417 = vld [vmem:[%s388 + $0x2] sm:$0x1]
        %v421 = vlaneseq
        %v422 = vshrl.u32 %v421, 7
        %v423 = vsub.s32 0, %v422
        %v424 = vrot.slane %v415, %v423
        %v425 = vlaneseq
        %v426 = vshrl.u32 %v425, 7
        %v427 = vsub.s32 0, %v426
        %v428 = vrot.slane %v416, %v427
        %v429 = vlaneseq
        %v430 = vshrl.u32 %v429, 7
        %v431 = vsub.s32 0, %v430
        %v432 = vrot.slane %v417, %v431
        %v440 = vunpack.c.l.b16 %v403
        %v441 = vunpack.c.l.b16 %v404
        %v442 = vunpack.c.l.b16 %v405
        %v443 = vunpack.c.l.b16 %v406
        %v444 = vpack.c.b16 %v441, %v440
        %v445 = vpack.c.b16 %v443, %v442
        %vm446 = vcmask 261120
        %v448 = vsel %vm446, %v402, 0
        %v451 = vsel %vm446, %v444, 0
        %v454 = vsel %vm446, %v445, 0
        %456 = vmatprep.subr.bf16.mxu0 0
        %457 = vmatpush1.bf16.xpose.msra.mxu0 %v451
        %458 = vmatprep.subr.bf16.mxu0 0
        %459 = vmatpush1.bf16.xpose.msra.mxu0 %v454
        %460 = vmatprep.subr.bf16.mxu0 0
        %461 = vmatpush1.bf16.xpose.msra.mxu0 0
        %462 = vmatprep.subr.bf16.mxu0 0
        %463 = vmatpush1.bf16.xpose.msra.mxu0 0
        %464 = vmatprep.subr.bf16.mxu0 0
        %465 = vmatpush1.bf16.xpose.msra.mxu0 0
        %466 = vmatprep.subr.bf16.mxu0 0
        %467 = vmatpush1.bf16.xpose.msra.mxu0 0
        %468 = vmatprep.subr.bf16.mxu0 0
        %469 = vmatpush1.bf16.xpose.msra.mxu0 0
        %470 = vmatprep.subr.bf16.mxu0 0
        %471 = vmatpush1.bf16.xpose.msra.mxu0 0
        %472 = vmatprep.subr.bf16.mxu0 0
        %473 = vmatpush1.bf16.xpose.msra.mxu0 0
        %474 = vmatprep.subr.bf16.mxu0 0
        %475 = vmatpush1.bf16.xpose.msra.mxu0 0
        %476 = vmatprep.subr.bf16.mxu0 0
        %477 = vmatpush1.bf16.xpose.msra.mxu0 0
        %478 = vmatprep.subr.bf16.mxu0 0
        %479 = vmatpush1.bf16.xpose.msra.mxu0 0
        %480 = vmatprep.subr.bf16.mxu0 0
        %481 = vmatpush1.bf16.xpose.msra.mxu0 0
        %482 = vmatprep.subr.bf16.mxu0 0
        %483 = vmatpush1.bf16.xpose.msra.mxu0 0
        %484 = vmatprep.subr.bf16.mxu0 0
        %485 = vmatpush1.bf16.xpose.msra.mxu0 0
        %486 = vmatprep.subr.bf16.mxu0 0
        %487 = vmatpush1.bf16.xpose.msra.mxu0 0
        %488 = vmatprep.mubr.bf16.mxu0 0
        %489 = vmatmul.mubr.bf16.gmra.mrb[0].mxu0 %v448
        %v490 = vpop.f32.mrb[0].mxu0
        %v491 = vadd.f32 %v424, %v490
        %v492 = vpop.f32.mrb[0].mxu0
        %v493 = vpop.f32.mrb[0].mxu0
        %v494 = vpop.f32.mrb[0].mxu0
        %495 = vdwg.mxu0
        %v500 = vunpack.c.l.b16 %v407
        %v501 = vunpack.c.l.b16 %v408
        %v502 = vunpack.c.l.b16 %v409
        %v503 = vunpack.c.l.b16 %v410
        %v504 = vpack.c.b16 %v501, %v500
        %v505 = vpack.c.b16 %v503, %v502
        %v507 = vsel %vm446, %v504, 0
        %v510 = vsel %vm446, %v505, 0
        %512 = vmatprep.subr.bf16.mxu0 0
        %513 = vmatpush1.bf16.xpose.msra.mxu0 %v507
        %514 = vmatprep.subr.bf16.mxu0 0
        %515 = vmatpush1.bf16.xpose.msra.mxu0 %v510
        %516 = vmatprep.subr.bf16.mxu0 0
        %517 = vmatpush1.bf16.xpose.msra.mxu0 0
        %518 = vmatprep.subr.bf16.mxu0 0
        %519 = vmatpush1.bf16.xpose.msra.mxu0 0
        %520 = vmatprep.subr.bf16.mxu0 0
        %521 = vmatpush1.bf16.xpose.msra.mxu0 0
        %522 = vmatprep.subr.bf16.mxu0 0
        %523 = vmatpush1.bf16.xpose.msra.mxu0 0
        %524 = vmatprep.subr.bf16.mxu0 0
        %525 = vmatpush1.bf16.xpose.msra.mxu0 0
        %526 = vmatprep.subr.bf16.mxu0 0
        %527 = vmatpush1.bf16.xpose.msra.mxu0 0
        %528 = vmatprep.subr.bf16.mxu0 0
        %529 = vmatpush1.bf16.xpose.msra.mxu0 0
        %530 = vmatprep.subr.bf16.mxu0 0
        %531 = vmatpush1.bf16.xpose.msra.mxu0 0
        %532 = vmatprep.subr.bf16.mxu0 0
        %533 = vmatpush1.bf16.xpose.msra.mxu0 0
        %534 = vmatprep.subr.bf16.mxu0 0
        %535 = vmatpush1.bf16.xpose.msra.mxu0 0
        %536 = vmatprep.subr.bf16.mxu0 0
        %537 = vmatpush1.bf16.xpose.msra.mxu0 0
        %538 = vmatprep.subr.bf16.mxu0 0
        %539 = vmatpush1.bf16.xpose.msra.mxu0 0
        %540 = vmatprep.subr.bf16.mxu0 0
        %541 = vmatpush1.bf16.xpose.msra.mxu0 0
        %542 = vmatprep.subr.bf16.mxu0 0
        %543 = vmatpush1.bf16.xpose.msra.mxu0 0
        %544 = vmatprep.mubr.bf16.mxu0 0
        %545 = vmatmul.mubr.bf16.gmra.mrb[0].mxu0 %v448
        %v546 = vpop.f32.mrb[0].mxu0
        %v547 = vadd.f32 %v428, %v546
        %v548 = vpop.f32.mrb[0].mxu0
        %v549 = vpop.f32.mrb[0].mxu0
        %v550 = vpop.f32.mrb[0].mxu0
        %551 = vdwg.mxu0
        %v556 = vunpack.c.l.b16 %v411
        %v557 = vunpack.c.l.b16 %v412
        %v558 = vunpack.c.l.b16 %v413
        %v559 = vunpack.c.l.b16 %v414
        %v560 = vpack.c.b16 %v557, %v556
        %v561 = vpack.c.b16 %v559, %v558
        %v563 = vsel %vm446, %v560, 0
        %v566 = vsel %vm446, %v561, 0
        %568 = vmatprep.subr.bf16.mxu0 0
        %569 = vmatpush1.bf16.xpose.msra.mxu0 %v563
        %570 = vmatprep.subr.bf16.mxu0 0
        %571 = vmatpush1.bf16.xpose.msra.mxu0 %v566
        %572 = vmatprep.subr.bf16.mxu0 0
        %573 = vmatpush1.bf16.xpose.msra.mxu0 0
        %574 = vmatprep.subr.bf16.mxu0 0
        %575 = vmatpush1.bf16.xpose.msra.mxu0 0
        %576 = vmatprep.subr.bf16.mxu0 0
        %577 = vmatpush1.bf16.xpose.msra.mxu0 0
        %578 = vmatprep.subr.bf16.mxu0 0
        %579 = vmatpush1.bf16.xpose.msra.mxu0 0
        %580 = vmatprep.subr.bf16.mxu0 0
        %581 = vmatpush1.bf16.xpose.msra.mxu0 0
        %582 = vmatprep.subr.bf16.mxu0 0
        %583 = vmatpush1.bf16.xpose.msra.mxu0 0
        %584 = vmatprep.subr.bf16.mxu0 0
        %585 = vmatpush1.bf16.xpose.msra.mxu0 0
        %586 = vmatprep.subr.bf16.mxu0 0
        %587 = vmatpush1.bf16.xpose.msra.mxu0 0
        %588 = vmatprep.subr.bf16.mxu0 0
        %589 = vmatpush1.bf16.xpose.msra.mxu0 0
        %590 = vmatprep.subr.bf16.mxu0 0
        %591 = vmatpush1.bf16.xpose.msra.mxu0 0
        %592 = vmatprep.subr.bf16.mxu0 0
        %593 = vmatpush1.bf16.xpose.msra.mxu0 0
        %594 = vmatprep.subr.bf16.mxu0 0
        %595 = vmatpush1.bf16.xpose.msra.mxu0 0
        %596 = vmatprep.subr.bf16.mxu0 0
        %597 = vmatpush1.bf16.xpose.msra.mxu0 0
        %598 = vmatprep.subr.bf16.mxu0 0
        %599 = vmatpush1.bf16.xpose.msra.mxu0 0
        %600 = vmatprep.mubr.bf16.mxu0 0
        %601 = vmatmul.mubr.bf16.gmra.mrb[0].mxu0 %v448
        %v602 = vpop.f32.mrb[0].mxu0
        %v603 = vadd.f32 %v432, %v602
        %v604 = vpop.f32.mrb[0].mxu0
        %v605 = vpop.f32.mrb[0].mxu0
        %v606 = vpop.f32.mrb[0].mxu0
        %607 = vdwg.mxu0
        %v608 = vmax.f32 %v491, 0.0
        %v609 = vmax.f32 %v547, 0.0
        %v610 = vmax.f32 %v603, 0.0
        %v611 = vpack.c.bf16 %v608, %v608
        %v612 = vpack.c.bf16 %v609, %v609
        %v613 = vpack.c.bf16 %v610, %v610
        %v614 = vld [vmem:[%s336] sm:$0xf]
        %v615 = vld [vmem:[%s336 + $0x4] sm:$0xf]
        %v616 = vld [vmem:[%s336 + $0x8] sm:$0xf]
        %v617 = vld [vmem:[%s336 + $0xc] sm:$0xf]
        %v618 = vld [vmem:[%s336 + $0x10] sm:$0xf]
        %v619 = vld [vmem:[%s336 + $0x14] sm:$0xf]
        %v620 = vld [vmem:[%s394] sm:$0x1]
        %v621 = vld [vmem:[%s394 + $0x1] sm:$0x1]
        %v622 = vld [vmem:[%s394 + $0x2] sm:$0x1]
        %v626 = vlaneseq
        %v627 = vshrl.u32 %v626, 7
        %v628 = vsub.s32 0, %v627
        %v629 = vrot.slane %v620, %v628
        %v630 = vlaneseq
        %v631 = vshrl.u32 %v630, 7
        %v632 = vsub.s32 0, %v631
        %v633 = vrot.slane %v621, %v632
        %v634 = vlaneseq
        %v635 = vshrl.u32 %v634, 7
        %v636 = vsub.s32 0, %v635
        %v637 = vrot.slane %v622, %v636
        %v643 = vunpack.c.l.b16 %v614
        %v644 = vunpack.c.l.b16 %v615
        %v645 = vpack.c.b16 %v644, %v643
        %v647 = vsel %vm446, %v611, 0
        %v650 = vsel %vm446, %v645, 0
        %652 = vmatprep.subr.bf16.mxu0 0
        %653 = vmatpush1.bf16.xpose.msra.mxu0 %v650
        %654 = vmatprep.subr.bf16.mxu0 0
        %655 = vmatpush1.bf16.xpose.msra.mxu0 0
        %656 = vmatprep.subr.bf16.mxu0 0
        %657 = vmatpush1.bf16.xpose.msra.mxu0 0
        %658 = vmatprep.subr.bf16.mxu0 0
        %659 = vmatpush1.bf16.xpose.msra.mxu0 0
        %660 = vmatprep.subr.bf16.mxu0 0
        %661 = vmatpush1.bf16.xpose.msra.mxu0 0
        %662 = vmatprep.subr.bf16.mxu0 0
        %663 = vmatpush1.bf16.xpose.msra.mxu0 0
        %664 = vmatprep.subr.bf16.mxu0 0
        %665 = vmatpush1.bf16.xpose.msra.mxu0 0
        %666 = vmatprep.subr.bf16.mxu0 0
        %667 = vmatpush1.bf16.xpose.msra.mxu0 0
        %668 = vmatprep.subr.bf16.mxu0 0
        %669 = vmatpush1.bf16.xpose.msra.mxu0 0
        %670 = vmatprep.subr.bf16.mxu0 0
        %671 = vmatpush1.bf16.xpose.msra.mxu0 0
        %672 = vmatprep.subr.bf16.mxu0 0
        %673 = vmatpush1.bf16.xpose.msra.mxu0 0
        %674 = vmatprep.subr.bf16.mxu0 0
        %675 = vmatpush1.bf16.xpose.msra.mxu0 0
        %676 = vmatprep.subr.bf16.mxu0 0
        %677 = vmatpush1.bf16.xpose.msra.mxu0 0
        %678 = vmatprep.subr.bf16.mxu0 0
        %679 = vmatpush1.bf16.xpose.msra.mxu0 0
        %680 = vmatprep.subr.bf16.mxu0 0
        %681 = vmatpush1.bf16.xpose.msra.mxu0 0
        %682 = vmatprep.subr.bf16.mxu0 0
        %683 = vmatpush1.bf16.xpose.msra.mxu0 0
        %684 = vmatprep.mubr.bf16.mxu0 0
        %685 = vmatmul.mubr.bf16.gmra.mrb[0].mxu0 %v647
        %v686 = vpop.f32.mrb[0].mxu0
        %v687 = vadd.f32 %v629, %v686
        %v688 = vpop.f32.mrb[0].mxu0
        %v689 = vpop.f32.mrb[0].mxu0
        %v690 = vpop.f32.mrb[0].mxu0
        %691 = vdwg.mxu0
        %v694 = vunpack.c.l.b16 %v616
        %v695 = vunpack.c.l.b16 %v617
        %v696 = vpack.c.b16 %v695, %v694
        %v698 = vsel %vm446, %v612, 0
        %v701 = vsel %vm446, %v696, 0
        %703 = vmatprep.subr.bf16.mxu0 0
        %704 = vmatpush1.bf16.xpose.msra.mxu0 %v701
        %705 = vmatprep.subr.bf16.mxu0 0
        %706 = vmatpush1.bf16.xpose.msra.mxu0 0
        %707 = vmatprep.subr.bf16.mxu0 0
        %708 = vmatpush1.bf16.xpose.msra.mxu0 0
        %709 = vmatprep.subr.bf16.mxu0 0
        %710 = vmatpush1.bf16.xpose.msra.mxu0 0
        %711 = vmatprep.subr.bf16.mxu0 0
        %712 = vmatpush1.bf16.xpose.msra.mxu0 0
        %713 = vmatprep.subr.bf16.mxu0 0
        %714 = vmatpush1.bf16.xpose.msra.mxu0 0
        %715 = vmatprep.subr.bf16.mxu0 0
        %716 = vmatpush1.bf16.xpose.msra.mxu0 0
        %717 = vmatprep.subr.bf16.mxu0 0
        %718 = vmatpush1.bf16.xpose.msra.mxu0 0
        %719 = vmatprep.subr.bf16.mxu0 0
        %720 = vmatpush1.bf16.xpose.msra.mxu0 0
        %721 = vmatprep.subr.bf16.mxu0 0
        %722 = vmatpush1.bf16.xpose.msra.mxu0 0
        %723 = vmatprep.subr.bf16.mxu0 0
        %724 = vmatpush1.bf16.xpose.msra.mxu0 0
        %725 = vmatprep.subr.bf16.mxu0 0
        %726 = vmatpush1.bf16.xpose.msra.mxu0 0
        %727 = vmatprep.subr.bf16.mxu0 0
        %728 = vmatpush1.bf16.xpose.msra.mxu0 0
        %729 = vmatprep.subr.bf16.mxu0 0
        %730 = vmatpush1.bf16.xpose.msra.mxu0 0
        %731 = vmatprep.subr.bf16.mxu0 0
        %732 = vmatpush1.bf16.xpose.msra.mxu0 0
        %733 = vmatprep.subr.bf16.mxu0 0
        %734 = vmatpush1.bf16.xpose.msra.mxu0 0
        %735 = vmatprep.mubr.bf16.mxu0 0
        %736 = vmatmul.mubr.bf16.gmra.mrb[0].mxu0 %v698
        %v737 = vpop.f32.mrb[0].mxu0
        %v738 = vadd.f32 %v633, %v737
        %v739 = vpop.f32.mrb[0].mxu0
        %v740 = vpop.f32.mrb[0].mxu0
        %v741 = vpop.f32.mrb[0].mxu0
        %742 = vdwg.mxu0
        %v745 = vunpack.c.l.b16 %v618
        %v746 = vunpack.c.l.b16 %v619
        %v747 = vpack.c.b16 %v746, %v745
        %v749 = vsel %vm446, %v613, 0
        %v752 = vsel %vm446, %v747, 0
        %754 = vmatprep.subr.bf16.mxu0 0
        %755 = vmatpush1.bf16.xpose.msra.mxu0 %v752
        %756 = vmatprep.subr.bf16.mxu0 0
        %757 = vmatpush1.bf16.xpose.msra.mxu0 0
        %758 = vmatprep.subr.bf16.mxu0 0
        %759 = vmatpush1.bf16.xpose.msra.mxu0 0
        %760 = vmatprep.subr.bf16.mxu0 0
        %761 = vmatpush1.bf16.xpose.msra.mxu0 0
        %762 = vmatprep.subr.bf16.mxu0 0
        %763 = vmatpush1.bf16.xpose.msra.mxu0 0
        %764 = vmatprep.subr.bf16.mxu0 0
        %765 = vmatpush1.bf16.xpose.msra.mxu0 0
        %766 = vmatprep.subr.bf16.mxu0 0
        %767 = vmatpush1.bf16.xpose.msra.mxu0 0
        %768 = vmatprep.subr.bf16.mxu0 0
        %769 = vmatpush1.bf16.xpose.msra.mxu0 0
        %770 = vmatprep.subr.bf16.mxu0 0
        %771 = vmatpush1.bf16.xpose.msra.mxu0 0
        %772 = vmatprep.subr.bf16.mxu0 0
        %773 = vmatpush1.bf16.xpose.msra.mxu0 0
        %774 = vmatprep.subr.bf16.mxu0 0
        %775 = vmatpush1.bf16.xpose.msra.mxu0 0
        %776 = vmatprep.subr.bf16.mxu0 0
        %777 = vmatpush1.bf16.xpose.msra.mxu0 0
        %778 = vmatprep.subr.bf16.mxu0 0
        %779 = vmatpush1.bf16.xpose.msra.mxu0 0
        %780 = vmatprep.subr.bf16.mxu0 0
        %781 = vmatpush1.bf16.xpose.msra.mxu0 0
        %782 = vmatprep.subr.bf16.mxu0 0
        %783 = vmatpush1.bf16.xpose.msra.mxu0 0
        %784 = vmatprep.subr.bf16.mxu0 0
        %785 = vmatpush1.bf16.xpose.msra.mxu0 0
        %786 = vmatprep.mubr.bf16.mxu0 0
        %787 = vmatmul.mubr.bf16.gmra.mrb[0].mxu0 %v749
        %v788 = vpop.f32.mrb[0].mxu0
        %v789 = vadd.f32 %v637, %v788
        %v790 = vpop.f32.mrb[0].mxu0
        %v791 = vpop.f32.mrb[0].mxu0
        %v792 = vpop.f32.mrb[0].mxu0
        %793 = vdwg.mxu0
        %vm794 = vcmask 130048
        %795 = vst.msk [vmem:[%s377] sm:$0xff] %vm794, %v687
        %796 = vst.msk [vmem:[%s377 + $0x8] sm:$0xff] %vm794, %v738
        %797 = vst.msk [vmem:[%s377 + $0x10] sm:$0xff] %vm794, %v789
        %v798 = vlaneseq
        %v799 = vand.u32 %v798, 127
        %v800 = vld [vmem:[%s5] sm:$0xff]
        %801 = vset.pattern.permute.xlu0 0
        %802 = vperm.xlu0 %801, %v800
        %v803 = vpop.permute.xlu0 %802
        %vm804 = vcmp.eq.s32.totalorder %v799, %v803
        %v805 = vsel %vm804, 1, 0
        %v806 = vcvt.s32.f32 %v805
        %v807 = vsel %vm794, %v687, -inf
        %808 = vmax.xlane.f32.xlu0 %v807
        %v809 = vpop.xlane.xlu0 %808
        %v810 = vsel %vm794, %v738, -inf
        %811 = vmax.xlane.f32.xlu0 %v810
        %v812 = vpop.xlane.xlu0 %811
        %v813 = vsel %vm794, %v789, -inf
        %814 = vmax.xlane.f32.xlu0 %v813
        %v815 = vpop.xlane.xlu0 %814
        %v816 = vsub.f32 %v687, %v809
        %v817 = vsub.f32 %v738, %v812
        %v818 = vsub.f32 %v789, %v815
        %v819 = vmul.f32 %v816, 1.442695
        %v820 = vpow.pop %v819
        %v821 = vmul.f32 %v817, 1.442695
        %v822 = vpow.pop %v821
        %v823 = vmul.f32 %v818, 1.442695
        %v824 = vpow.pop %v823
        %v825 = vsel %vm794, %v820, 0.0
        %826 = vadd.xlane.f32.xlu0 %v825
        %v827 = vpop.xlane.xlu0 %826
        %v828 = vsel %vm794, %v822, 0.0
        %829 = vadd.xlane.f32.xlu0 %v828
        %v830 = vpop.xlane.xlu0 %829
        %v831 = vsel %vm794, %v824, 0.0
        %832 = vadd.xlane.f32.xlu0 %v831
        %v833 = vpop.xlane.xlu0 %832
        %v834 = vmul.f32 %v687, %v806
        %v835 = vmul.f32 %v738, %v806
        %v836 = vmul.f32 %v789, %v806
        %v837 = vsel %vm794, %v834, 0.0
        %838 = vadd.xlane.f32.xlu0 %v837
        %v839 = vpop.xlane.xlu0 %838
        %v840 = vsel %vm794, %v835, 0.0
        %841 = vadd.xlane.f32.xlu0 %v840
        %v842 = vpop.xlane.xlu0 %841
        %v843 = vsel %vm794, %v836, 0.0
        %844 = vadd.xlane.f32.xlu0 %v843
        %v845 = vpop.xlane.xlu0 %844
        %v846 = vlog2.pop %v827
        %v847 = vmul.f32 %v846, 0.6931472
        %v848 = vlog2.pop %v830
        %v849 = vmul.f32 %v848, 0.6931472
        %v850 = vlog2.pop %v833
        %v851 = vmul.f32 %v850, 0.6931472
        %v852 = vadd.f32 %v809, %v847
        %v853 = vadd.f32 %v812, %v849
        %v854 = vadd.f32 %v815, %v851
        %v855 = vsub.f32 %v852, %v839
        %v856 = vsub.f32 %v853, %v842
        %v857 = vsub.f32 %v854, %v845
        %v861 = vlaneseq
        %v862 = vshrl.u32 %v861, 7
        %v863 = vsub.s32 %v799, %v862
        %v864 = vrot.slane %v855, %v863
        %v865 = vlaneseq
        %v866 = vshrl.u32 %v865, 7
        %v867 = vsub.s32 %v799, %v866
        %v868 = vrot.slane %v856, %v867
        %v869 = vlaneseq
        %v870 = vshrl.u32 %v869, 7
        %v871 = vsub.s32 %v799, %v870
        %v872 = vrot.slane %v857, %v871
        %vm873 = vcmask 1041409
        %v874 = vsel %vm873, %v868, %v864
        %vm875 = vcmask 1042434
        %v876 = vsel %vm875, %v872, %v874
        %vm878 = vcmask 59392
        %879 = vst.msk [vmem:[%s400] sm:$0x7] %vm878, %v876
        %s880 = sand.u32 %s180, 1
        %s881 = scalar_lea.sflag [#allocation4], %s880
        %s882 = sand.u32 %s180, 1
        %s883 = smul.addr %s882, 24
        %s884 = scalar_lea.vmem [#allocation8], %s883
        %p885 = scmp.lt.s32.totalorder %s26, 1
        %s886 = scalar_select %p885, %s26, 1
        %s887 = smul.addr %s886, 4
        %s888 = scalar_lea.vmem %s7, %s887
        // Predicated region
        $region57: #{tpu_custom_call.1} parent=43 // pred_check
          %p889 = pneg %p190
        $region58: #{tpu_custom_call.1} parent=43 // pred_check_branch
          %891 = sbr.rel (%p889) target = $region60
        $region59: #{tpu_custom_call.1} parent=43 // pred_region
          %s892 = smul.u32 3, %s26
          %s894 = ssub.s32 384, 384
          %895 = vsyncadd %s881, %s894
          %s896 = smul.addr %s892, 128
          %s897 = scalar_lea.hbm %s6, %s896
          %s898 = sshll.u32 %s884, 4
          %s899 = int_to_ptr.vmem [resolvable:$true] %s898
          %904 = dma.vmem_to_hbm [thread:$0]  %s899, 384, %s897, %s881, 128, 128, 8
        $region60: #{tpu_custom_call.1} parent=43 // pred_fallthru
          _
        // Predicated region
        $region61: #{tpu_custom_call.1} parent=43 // pred_check
          %p905 = pneg %p216
        $region62: #{tpu_custom_call.1} parent=43 // pred_check_branch
          %907 = sbr.rel (%p905) target = $region64
        $region63: #{tpu_custom_call.1} parent=43 // pred_region
          _
        $region64: #{tpu_custom_call.1} parent=43 // pred_fallthru
          _
      $region44: #{tpu_custom_call.1} parent=5 // pred_fallthru
        _
      %p908 = scmp.le.s32.totalorder 2, %s21
      // Predicated region
      $region65: #{tpu_custom_call.1} parent=5 // pred_check
        %p909 = pneg %p908
      $region66: #{tpu_custom_call.1} parent=5 // pred_check_branch
        %911 = sbr.rel (%p909) target = $region68
      $region67: #{tpu_custom_call.1} parent=5 // pred_region
        %s912 = ssub.s32 %s21, 2
        // Predicated region
        $region69: #{tpu_custom_call.1} parent=67 // pred_check
          %p913 = pneg %p196
        $region70: #{tpu_custom_call.1} parent=67 // pred_check_branch
          %915 = sbr.rel (%p913) target = $region72
        $region71: #{tpu_custom_call.1} parent=67 // pred_region
          %s916 = sand.u32 %s181, 1
          %s917 = scalar_lea.sflag [#allocation4], %s916
          %s918 = sand.u32 %s181, 1
          %s919 = smul.addr %s918, 24
          %s920 = scalar_lea.vmem [#allocation8], %s919
          %921 = dma.done %s917, 384
        $region72: #{tpu_custom_call.1} parent=67 // pred_fallthru
          _
        // Predicated region
        $region73: #{tpu_custom_call.1} parent=67 // pred_check
          %p922 = pneg %p222
        $region74: #{tpu_custom_call.1} parent=67 // pred_check_branch
          %924 = sbr.rel (%p922) target = $region76
        $region75: #{tpu_custom_call.1} parent=67 // pred_region
          %p925 = scmp.lt.s32.totalorder %s27, 1
          %s926 = scalar_select %p925, %s27, 1
          %s927 = smul.addr %s926, 4
          %s928 = scalar_lea.vmem %s7, %s927
        $region76: #{tpu_custom_call.1} parent=67 // pred_fallthru
          _
      $region68: #{tpu_custom_call.1} parent=5 // pred_fallthru
        _
    $region6: #{tpu_custom_call.1} parent=1 // loop_footer
      %s25 = sadd.s32 1, %s21
    $region7: #{tpu_custom_call.1} parent=1 // loop_footer_branch
      %20 = sbr.rel target = $region3
    $region8: #{tpu_custom_call.1} parent=1 // loop_exit
      _
    %929 = vsyncpa [#allocation3], 1
    %s930 = scalar_lea.sflag [#allocation3], 1
    %931 = vsyncpa %s930, 1
    %932 = vsyncpa [#allocation6], 1
    %s933 = scalar_lea.sflag [#allocation6], 1
    %934 = vsyncpa %s933, 1
    %935 = vsyncpa [#allocation4], 1
    %s936 = scalar_lea.sflag [#allocation4], 1
    %937 = vsyncpa %s936, 1

</llo_original>
